<compile_context>
chip_gen: v6e
topology: v6e:2x2x1
jax: 0.10.0
libtpu: 0.0.40
codegen_flags: <defaults>
</compile_context>

<pallas_src>
import jax
import jax.numpy as jnp
from jax import lax
from jax.experimental import pallas as pl
from jax.experimental.pallas import tpu as pltpu

BN_EPS = 1e-5
LANE = 128
SUBLANE = 8
VMEM_LIMIT = 32 * 1024 * 1024  # safe on v5e/v6e (128 MiB phys) and v7x (64 MiB phys)


def _round_up(a, b):
    return (a + b - 1) // b * b


def _pick_row_tile(total_rows, target_rows):
    """Row tile: whole array if it fits the target, else a sublane-aligned tile."""
    if total_rows <= target_rows:
        return total_rows                      # full-dim block is always legal
    return max(SUBLANE, (target_rows // SUBLANE) * SUBLANE)


# ---------- Pass 1: streaming per-channel sum / sum-of-squares (BN batch stats) ----------

def _make_stats_kernel(rows_total, block_rows):
    need_mask = (rows_total % block_rows) != 0

    def kernel(x_ref, o_ref):
        @pl.when(pl.program_id(0) == 0)
        def _init():
            o_ref[...] = jnp.zeros_like(o_ref)

        x = x_ref[...].astype(jnp.float32)                       # (TS, Cp)
        if need_mask:                                            # only if last block is partial
            row = pl.program_id(0) * block_rows + lax.broadcasted_iota(
                jnp.int32, x.shape, 0)
            x = jnp.where(row < rows_total, x, 0.0)
        s = jnp.sum(x, axis=0, keepdims=True)                    # (1, Cp)
        ss = jnp.sum(x * x, axis=0, keepdims=True)               # (1, Cp)
        o_ref[...] += jnp.concatenate([s, ss], axis=0)           # resident accumulator

    return kernel


# ---------- Pass 2: fused 2x2 avg-pool -> BN-folded 1x1 conv (single matmul per tile) ----

def _make_main_kernel(cp):
    def kernel(x_ref, w_ref, b_ref, o_ref):
        # x_ref: (TR, 2, Wo, 2*Cp); rows are (n, ho), dim1 is the H pair,
        # the lane dim holds the W pair as two Cp-wide (lane-aligned) halves.
        x = x_ref[...].astype(jnp.float32)
        xw = x[..., :cp] + x[..., cp:]                           # sum over W pair  (TR,2,Wo,Cp)
        pooled = (xw[:, 0] + xw[:, 1]) * 0.25                    # sum over H pair  (TR,Wo,Cp)
        tr, wo, _ = pooled.shape
        y = jnp.dot(pooled.reshape(tr * wo, cp), w_ref[...],
                    preferred_element_type=jnp.float32)          # (TR*Wo, Coutp)
        o_ref[...] = (y + b_ref[...]).astype(o_ref.dtype)        # single lane-dense store

    return kernel


def transition_forward(x_nchw, w_oc, gamma, beta):
    """x_nchw: (N, Cin, H, W); w_oc: (Cout, Cin) 1x1 conv weight. Returns NCHW."""
    N, C, H, W = x_nchw.shape
    Cout = w_oc.shape[0]
    Ho, Wo = H // 2, W // 2          # AvgPool2d(2,2): odd trailing row/col is dropped
    He, We = 2 * Ho, 2 * Wo

    Cp = _round_up(C, LANE)          # lane-pad input channels
    Coutp = _round_up(Cout, LANE)    # lane-dense output stores

    # NCHW -> NHWC (channels on the lane dim), zero-pad channels once.
    x_nhwc = jnp.transpose(x_nchw, (0, 2, 3, 1)).astype(jnp.float32)      # (N, H, W, C)
    if Cp != C:
        x_nhwc = jnp.pad(x_nhwc, ((0, 0), (0, 0), (0, 0), (0, Cp - C)))

    # ---- Pass 1: batch statistics, streamed over row tiles. ----
    R = N * H * W
    x_flat = x_nhwc.reshape(R, Cp)                                        # free reshape
    TS = _pick_row_tile(R, 512)
    sums = pl.pallas_call(
        _make_stats_kernel(R, TS),
        out_shape=jax.ShapeDtypeStruct((2, Cp), jnp.float32),
        grid=(pl.cdiv(R, TS),),
        in_specs=[pl.BlockSpec((TS, Cp), lambda i: (i, 0))],
        out_specs=pl.BlockSpec((2, Cp), lambda i: (0, 0)),
        compiler_params=pltpu.CompilerParams(
            dimension_semantics=("arbitrary",),        # reduction into resident block
            vmem_limit_bytes=VMEM_LIMIT),
    )(x_flat)

    # ---- Fold BN (training batch stats, biased variance) into the 1x1 conv. ----
    cnt = jnp.float32(R)
    mean = sums[0, :C] / cnt
    var = jnp.maximum(sums[1, :C] / cnt - mean * mean, 0.0)
    scale = gamma.astype(jnp.float32) * lax.rsqrt(var + BN_EPS)           # inv_std * gamma
    w_ck = jnp.transpose(w_oc.astype(jnp.float32), (1, 0))                # (Cin, Cout)
    w_fold = jnp.pad(w_ck * scale[:, None], ((0, Cp - C), (0, Coutp - Cout)))
    bias = jnp.pad((beta.astype(jnp.float32) - mean * scale) @ w_ck,
                   (0, Coutp - Cout)).reshape(1, Coutp)

    # ---- Pass 2: tiled pool + matmul over (N*Ho) row tiles. ----
    x_main = x_nhwc if (He == H and We == W) else x_nhwc[:, :He, :We, :]
    NHo = N * Ho
    x4 = x_main.reshape(NHo, 2, Wo, 2 * Cp)                               # free reshape

    in_row_bytes = 4 * Wo * Cp * 4            # one (n, ho) row of the f32 input block
    out_row_bytes = Wo * Coutp * 4
    budget = 8 * 1024 * 1024                  # double-buffered blocks stay well under scoped VMEM
    target_rows = max(SUBLANE, budget // (2 * (in_row_bytes + out_row_bytes)))
    TR = _pick_row_tile(NHo, target_rows)

    out_flat = pl.pallas_call(
        _make_main_kernel(Cp),
        out_shape=jax.ShapeDtypeStruct((NHo * Wo, Coutp), jnp.float32),
        grid=(pl.cdiv(NHo, TR),),
        in_specs=[
            pl.BlockSpec((TR, 2, Wo, 2 * Cp), lambda i: (i, 0, 0, 0)),    # x row tile
            pl.BlockSpec((Cp, Coutp), lambda i: (0, 0)),                  # folded weight (resident)
            pl.BlockSpec((1, Coutp), lambda i: (0, 0)),                   # folded bias row
        ],
        out_specs=pl.BlockSpec((TR * Wo, Coutp), lambda i: (i, 0)),
        compiler_params=pltpu.CompilerParams(
            dimension_semantics=("parallel",),         # independent row tiles (megacore on v7x)
            vmem_limit_bytes=VMEM_LIMIT),
    )(x4, w_fold, bias)

    out = out_flat[:, :Cout].reshape(N, Ho, Wo, Cout)
    # TODO(synk): skip this NCHW transpose if the downstream consumer accepts NHWC.
    return jnp.transpose(out, (0, 3, 1, 2)).astype(x_nchw.dtype)


def transition_reference(x_nchw, w_oc, gamma, beta):
    """Pure-JAX reference with identical semantics (NCHW)."""
    mean = jnp.mean(x_nchw, axis=(0, 2, 3), keepdims=True)
    var = jnp.mean((x_nchw - mean) ** 2, axis=(0, 2, 3), keepdims=True)
    xhat = (x_nchw - mean) * lax.rsqrt(var + BN_EPS)
    xhat = xhat * gamma.reshape(1, -1, 1, 1) + beta.reshape(1, -1, 1, 1)
    y = jnp.einsum("nchw,oc->nohw", xhat, w_oc)
    N, Co, H, W = y.shape
    y = y.reshape(N, Co, H // 2, 2, W // 2, 2).mean(axis=(3, 5))
    return y


if __name__ == "__main__":
    key = jax.random.PRNGKey(0)
    kx, kw, kg, kb = jax.random.split(key, 4)

    N, Cin, H, W = 2, 4, 16, 16
    Cout = 8

    x = jax.random.normal(kx, (N, Cin, H, W), dtype=jnp.float32)

    # Deterministic parameter init (PyTorch-style kaiming-uniform bound for 1x1 conv).
    bound = 1.0 / jnp.sqrt(jnp.float32(Cin))
    w_oc = jax.random.uniform(kw, (Cout, Cin), dtype=jnp.float32,
                              minval=-bound, maxval=bound)
    gamma = 1.0 + 0.1 * jax.random.normal(kg, (Cin,), dtype=jnp.float32)
    beta = 0.1 * jax.random.normal(kb, (Cin,), dtype=jnp.float32)

    out = transition_forward(x, w_oc, gamma, beta)
    out = jax.block_until_ready(out)

    ref = transition_reference(x, w_oc, gamma, beta)
    assert out.shape == (N, Cout, H // 2, W // 2), out.shape
    assert jnp.allclose(out, ref, atol=1e-4, rtol=1e-4), float(jnp.max(jnp.abs(out - ref)))

    print("KERNEL_OK")
</pallas_src>

<mosaic_0001>
module attributes {stable_mosaic.version = 11 : i64} {
  func.func @kernel(%arg0: i32, %arg1: memref<512x128xf32, #tpu.memory_space<vmem>>, %arg2: memref<2x128xf32, #tpu.memory_space<vmem>>) attributes {dimension_semantics = [#tpu.dimension_semantics<arbitrary>], iteration_bounds = array<i64: 1>, scalar_prefetch = 0 : i64, scratch_operands = 0 : i64, tpu.core_type = #tpu.core_type<tc>, window_params = [{transform_indices = @transform_0, window_bounds = array<i64: 512, 128>}, {pipeline_mode = #tpu.pipeline_mode<synchronous>, transform_indices = @transform_1, window_bounds = array<i64: 2, 128>}]} {
    %c0_i32 = arith.constant 0 : i32
    %0 = arith.cmpi eq, %arg0, %c0_i32 : i32
    %1 = arith.extui %0 : i1 to i32
    %c0_i32_0 = arith.constant 0 : i32
    %2 = arith.cmpi ne, %1, %c0_i32_0 : i32
    scf.if %2 {
      %cst_7 = arith.constant 0.000000e+00 : f32
      %13 = vector.broadcast %cst_7 : f32 to vector<2x128xf32>
      %c0_8 = arith.constant 0 : index
      %c0_9 = arith.constant 0 : index
      %14 = vector.load %arg2[%c0_8, %c0_9] : memref<2x128xf32, #tpu.memory_space<vmem>>, vector<2x128xf32>
      tpu.vector_store %arg2[%c0_8, %c0_9], %13 {strides = array<i32>} : memref<2x128xf32, #tpu.memory_space<vmem>>, vector<2x128xf32>,
    } else {
    }
    %c0 = arith.constant 0 : index
    %c0_1 = arith.constant 0 : index
    %3 = vector.load %arg1[%c0, %c0_1] : memref<512x128xf32, #tpu.memory_space<vmem>>, vector<512x128xf32>
    %cst = arith.constant dense<0.000000e+00> : vector<128xf32>
    %4 = vector.multi_reduction <add>, %3, %cst [0] : vector<512x128xf32> to vector<128xf32>
    %5 = vector.shape_cast %4 : vector<128xf32> to vector<1x128xf32>
    %6 = arith.mulf %3, %3 : vector<512x128xf32>
    %cst_2 = arith.constant dense<0.000000e+00> : vector<128xf32>
    %7 = vector.multi_reduction <add>, %6, %cst_2 [0] : vector<512x128xf32> to vector<128xf32>
    %8 = vector.shape_cast %7 : vector<128xf32> to vector<1x128xf32>
    %c0_3 = arith.constant 0 : index
    %c0_4 = arith.constant 0 : index
    %9 = vector.load %arg2[%c0_3, %c0_4] : memref<2x128xf32, #tpu.memory_space<vmem>>, vector<2x128xf32>
    %10 = tpu.concatenate %5, %8 in 0 : vector<1x128xf32>, vector<1x128xf32> -> vector<2x128xf32>
    %11 = arith.addf %9, %10 : vector<2x128xf32>
    %c0_5 = arith.constant 0 : index
    %c0_6 = arith.constant 0 : index
    %12 = vector.load %arg2[%c0_5, %c0_6] : memref<2x128xf32, #tpu.memory_space<vmem>>, vector<2x128xf32>
    tpu.vector_store %arg2[%c0_5, %c0_6], %11 {strides = array<i32>} : memref<2x128xf32, #tpu.memory_space<vmem>>, vector<2x128xf32>,
    return
  }
  func.func @transform_0(%arg0: i32) -> (i32, i32) {
    %c0_i32 = arith.constant 0 : i32
    %c0_i32_0 = arith.constant 0 : i32
    return %arg0, %c0_i32 : i32, i32
  }
  func.func @transform_1(%arg0: i32) -> (i32, i32) {
    %c0_i32 = arith.constant 0 : i32
    %c0_i32_0 = arith.constant 0 : i32
    %c0_i32_1 = arith.constant 0 : i32
    return %c0_i32, %c0_i32_0 : i32, i32
  }
}

</mosaic_0001>

<llo_original>
// kernel: tpu_custom_call.1
$region0: #{tpu_custom_call.1}
  #allocation0 [shape = 'u32[]', space=smem, size = 0x4, offset = 0x4, fixed_abs, tag = 'smem constant byte address 0x4 - core index']
  #allocation1 [shape = 'u32[144,128]{1,0:T(1,128)}', space=vmem, size = 0x12000, scoped, tag = 'internal scratch']
  %s0 = inlined_call_operand.hbm [shape: f32[512,128], index: 0, kind: input, shape index: {}]
  %s1 = inlined_call_operand.hbm [shape: f32[2,128], index: 1, kind: output, shape index: {}]
  %s2 = sld [smem:[#allocation0]]
  $region22: #{tpu_custom_call.1} parent=0
    _
  %s4 = ssub.s32 1, %s2
  %s5 = scalar_select 0, %s4, %s2
  $region1: #{tpu_custom_call.1} parent=0
    #allocation2 [shape = 'u8[262144]{0}', space=vmem, size = 0x40000, scoped, tag = 'input window, operand 0, single buffered']
    #allocation3 [shape = 's32[1]{0}', space=sflag, size = 0x4, scoped, tag = 'scoped memory for tpu_custom_call.1']
    #allocation4 [shape = 's32[1]{0}', space=sflag, size = 0x4, scoped, tag = 'scoped memory for tpu_custom_call.1']
    #allocation5 [shape = 'u8[1024]{0}', space=vmem, size = 0x400, scoped, tag = 'output window, operand 0, single buffered']
    %6 = vsyncpa [#allocation3], 0
    %7 = vsyncpa [#allocation4], 0
    // Predicated region
    $region2: #{tpu_custom_call.1} parent=1 // pred_check
      _
    $region3: #{tpu_custom_call.1} parent=1 // pred_check_branch
      %9 = sbr.rel (0) target = $region5
    $region4: #{tpu_custom_call.1} parent=1 // pred_region
      %s11 = ssub.s32 8192, 8192
      %12 = vsyncadd [#allocation3], %s11
      %s13 = sshll.u32 [#allocation2], 4
      %s14 = int_to_ptr.vmem [resolvable:$true] %s13
      %19 = dma.hbm_to_vmem [thread:$0]  %s0, 8192, %s14, [#allocation3], 128, 128, 8
    $region5: #{tpu_custom_call.1} parent=1 // pred_fallthru
      _
    // Predicated region
    $region6: #{tpu_custom_call.1} parent=1 // pred_check
      _
    $region7: #{tpu_custom_call.1} parent=1 // pred_check_branch
      %21 = sbr.rel (0) target = $region9
    $region8: #{tpu_custom_call.1} parent=1 // pred_region
      %22 = dma.done [#allocation3], 8192
    $region9: #{tpu_custom_call.1} parent=1 // pred_fallthru
      _
    %p23 = scmp.eq.s32.totalorder 0, 0
    // Predicated region
    $region10: #{tpu_custom_call.1} parent=1 // pred_check
      %p24 = pneg %p23
    $region11: #{tpu_custom_call.1} parent=1 // pred_check_branch
      %26 = sbr.rel (%p24) target = $region13
    $region12: #{tpu_custom_call.1} parent=1 // pred_region
      %27 = vst [vmem:[#allocation5] sm:$0x3] 0.0
    $region13: #{tpu_custom_call.1} parent=1 // pred_fallthru
      _
    %v28 = vld [vmem:[#allocation2] sm:$0xff]
    %v29 = vld [vmem:[#allocation2 + $0x8] sm:$0xff]
    %v30 = vld [vmem:[#allocation2 + $0x10] sm:$0xff]
    %v31 = vld [vmem:[#allocation2 + $0x18] sm:$0xff]
    %v32 = vld [vmem:[#allocation2 + $0x20] sm:$0xff]
    %v33 = vld [vmem:[#allocation2 + $0x28] sm:$0xff]
    %v34 = vld [vmem:[#allocation2 + $0x30] sm:$0xff]
    %v35 = vld [vmem:[#allocation2 + $0x38] sm:$0xff]
    %v36 = vld [vmem:[#allocation2 + $0x40] sm:$0xff]
    %v37 = vld [vmem:[#allocation2 + $0x48] sm:$0xff]
    %v38 = vld [vmem:[#allocation2 + $0x50] sm:$0xff]
    %v39 = vld [vmem:[#allocation2 + $0x58] sm:$0xff]
    %v40 = vld [vmem:[#allocation2 + $0x60] sm:$0xff]
    %v41 = vld [vmem:[#allocation2 + $0x68] sm:$0xff]
    %v42 = vld [vmem:[#allocation2 + $0x70] sm:$0xff]
    %v43 = vld [vmem:[#allocation2 + $0x78] sm:$0xff]
    %v44 = vld [vmem:[#allocation2 + $0x80] sm:$0xff]
    %v45 = vld [vmem:[#allocation2 + $0x88] sm:$0xff]
    %v46 = vld [vmem:[#allocation2 + $0x90] sm:$0xff]
    %v47 = vld [vmem:[#allocation2 + $0x98] sm:$0xff]
    %v48 = vld [vmem:[#allocation2 + $0xa0] sm:$0xff]
    %v49 = vld [vmem:[#allocation2 + $0xa8] sm:$0xff]
    %v50 = vld [vmem:[#allocation2 + $0xb0] sm:$0xff]
    %v51 = vld [vmem:[#allocation2 + $0xb8] sm:$0xff]
    %v52 = vld [vmem:[#allocation2 + $0xc0] sm:$0xff]
    %v53 = vld [vmem:[#allocation2 + $0xc8] sm:$0xff]
    %v54 = vld [vmem:[#allocation2 + $0xd0] sm:$0xff]
    %v55 = vld [vmem:[#allocation2 + $0xd8] sm:$0xff]
    %v56 = vld [vmem:[#allocation2 + $0xe0] sm:$0xff]
    %v57 = vld [vmem:[#allocation2 + $0xe8] sm:$0xff]
    %v58 = vld [vmem:[#allocation2 + $0xf0] sm:$0xff]
    %v59 = vld [vmem:[#allocation2 + $0xf8] sm:$0xff]
    %v60 = vld [vmem:[#allocation2 + $0x100] sm:$0xff]
    %v61 = vld [vmem:[#allocation2 + $0x108] sm:$0xff]
    %v62 = vld [vmem:[#allocation2 + $0x110] sm:$0xff]
    %v63 = vld [vmem:[#allocation2 + $0x118] sm:$0xff]
    %v64 = vld [vmem:[#allocation2 + $0x120] sm:$0xff]
    %v65 = vld [vmem:[#allocation2 + $0x128] sm:$0xff]
    %v66 = vld [vmem:[#allocation2 + $0x130] sm:$0xff]
    %v67 = vld [vmem:[#allocation2 + $0x138] sm:$0xff]
    %v68 = vld [vmem:[#allocation2 + $0x140] sm:$0xff]
    %v69 = vld [vmem:[#allocation2 + $0x148] sm:$0xff]
    %v70 = vld [vmem:[#allocation2 + $0x150] sm:$0xff]
    %v71 = vld [vmem:[#allocation2 + $0x158] sm:$0xff]
    %v72 = vld [vmem:[#allocation2 + $0x160] sm:$0xff]
    %v73 = vld [vmem:[#allocation2 + $0x168] sm:$0xff]
    %v74 = vld [vmem:[#allocation2 + $0x170] sm:$0xff]
    %v75 = vld [vmem:[#allocation2 + $0x178] sm:$0xff]
    %v76 = vld [vmem:[#allocation2 + $0x180] sm:$0xff]
    %v77 = vld [vmem:[#allocation2 + $0x188] sm:$0xff]
    %v78 = vld [vmem:[#allocation2 + $0x190] sm:$0xff]
    %v79 = vld [vmem:[#allocation2 + $0x198] sm:$0xff]
    %v80 = vld [vmem:[#allocation2 + $0x1a0] sm:$0xff]
    %v81 = vld [vmem:[#allocation2 + $0x1a8] sm:$0xff]
    %v82 = vld [vmem:[#allocation2 + $0x1b0] sm:$0xff]
    %v83 = vld [vmem:[#allocation2 + $0x1b8] sm:$0xff]
    %v84 = vld [vmem:[#allocation2 + $0x1c0] sm:$0xff]
    %v85 = vld [vmem:[#allocation2 + $0x1c8] sm:$0xff]
    %v86 = vld [vmem:[#allocation2 + $0x1d0] sm:$0xff]
    %v87 = vld [vmem:[#allocation2 + $0x1d8] sm:$0xff]
    %v88 = vld [vmem:[#allocation2 + $0x1e0] sm:$0xff]
    %v89 = vld [vmem:[#allocation2 + $0x1e8] sm:$0xff]
    %v90 = vld [vmem:[#allocation2 + $0x1f0] sm:$0xff]
    %v91 = vld [vmem:[#allocation2 + $0x1f8] sm:$0xff]
    %v92 = vadd.f32 %v28, %v29
    %v93 = vadd.f32 %v92, %v30
    %v94 = vadd.f32 %v93, %v31
    %v95 = vadd.f32 %v94, %v32
    %v96 = vadd.f32 %v95, %v33
    %v97 = vadd.f32 %v96, %v34
    %v98 = vadd.f32 %v97, %v35
    %v99 = vadd.f32 %v98, %v36
    %v100 = vadd.f32 %v99, %v37
    %v101 = vadd.f32 %v100, %v38
    %v102 = vadd.f32 %v101, %v39
    %v103 = vadd.f32 %v102, %v40
    %v104 = vadd.f32 %v103, %v41
    %v105 = vadd.f32 %v104, %v42
    %v106 = vadd.f32 %v105, %v43
    %v107 = vadd.f32 %v106, %v44
    %v108 = vadd.f32 %v107, %v45
    %v109 = vadd.f32 %v108, %v46
    %v110 = vadd.f32 %v109, %v47
    %v111 = vadd.f32 %v110, %v48
    %v112 = vadd.f32 %v111, %v49
    %v113 = vadd.f32 %v112, %v50
    %v114 = vadd.f32 %v113, %v51
    %v115 = vadd.f32 %v114, %v52
    %v116 = vadd.f32 %v115, %v53
    %v117 = vadd.f32 %v116, %v54
    %v118 = vadd.f32 %v117, %v55
    %v119 = vadd.f32 %v118, %v56
    %v120 = vadd.f32 %v119, %v57
    %v121 = vadd.f32 %v120, %v58
    %v122 = vadd.f32 %v121, %v59
    %v123 = vadd.f32 %v122, %v60
    %v124 = vadd.f32 %v123, %v61
    %v125 = vadd.f32 %v124, %v62
    %v126 = vadd.f32 %v125, %v63
    %v127 = vadd.f32 %v126, %v64
    %v128 = vadd.f32 %v127, %v65
    %v129 = vadd.f32 %v128, %v66
    %v130 = vadd.f32 %v129, %v67
    %v131 = vadd.f32 %v130, %v68
    %v132 = vadd.f32 %v131, %v69
    %v133 = vadd.f32 %v132, %v70
    %v134 = vadd.f32 %v133, %v71
    %v135 = vadd.f32 %v134, %v72
    %v136 = vadd.f32 %v135, %v73
    %v137 = vadd.f32 %v136, %v74
    %v138 = vadd.f32 %v137, %v75
    %v139 = vadd.f32 %v138, %v76
    %v140 = vadd.f32 %v139, %v77
    %v141 = vadd.f32 %v140, %v78
    %v142 = vadd.f32 %v141, %v79
    %v143 = vadd.f32 %v142, %v80
    %v144 = vadd.f32 %v143, %v81
    %v145 = vadd.f32 %v144, %v82
    %v146 = vadd.f32 %v145, %v83
    %v147 = vadd.f32 %v146, %v84
    %v148 = vadd.f32 %v147, %v85
    %v149 = vadd.f32 %v148, %v86
    %v150 = vadd.f32 %v149, %v87
    %v151 = vadd.f32 %v150, %v88
    %v152 = vadd.f32 %v151, %v89
    %v153 = vadd.f32 %v152, %v90
    %v154 = vadd.f32 %v153, %v91
    %v155 = vrot.slane %v154, 4
    %v156 = vadd.f32 %v154, %v155
    %v157 = vrot.slane %v156, 2
    %v158 = vadd.f32 %v156, %v157
    %v159 = vrot.slane %v158, 1
    %v160 = vadd.f32 %v158, %v159
    %v161 = vmul.f32 %v28, %v28
    %v162 = vmul.f32 %v29, %v29
    %v163 = vmul.f32 %v30, %v30
    %v164 = vmul.f32 %v31, %v31
    %v165 = vmul.f32 %v32, %v32
    %v166 = vmul.f32 %v33, %v33
    %v167 = vmul.f32 %v34, %v34
    %v168 = vmul.f32 %v35, %v35
    %v169 = vmul.f32 %v36, %v36
    %v170 = vmul.f32 %v37, %v37
    %v171 = vmul.f32 %v38, %v38
    %v172 = vmul.f32 %v39, %v39
    %v173 = vmul.f32 %v40, %v40
    %v174 = vmul.f32 %v41, %v41
    %v175 = vmul.f32 %v42, %v42
    %v176 = vmul.f32 %v43, %v43
    %v177 = vmul.f32 %v44, %v44
    %v178 = vmul.f32 %v45, %v45
    %v179 = vmul.f32 %v46, %v46
    %v180 = vmul.f32 %v47, %v47
    %v181 = vmul.f32 %v48, %v48
    %v182 = vmul.f32 %v49, %v49
    %v183 = vmul.f32 %v50, %v50
    %v184 = vmul.f32 %v51, %v51
    %v185 = vmul.f32 %v52, %v52
    %v186 = vmul.f32 %v53, %v53
    %v187 = vmul.f32 %v54, %v54
    %v188 = vmul.f32 %v55, %v55
    %v189 = vmul.f32 %v56, %v56
    %v190 = vmul.f32 %v57, %v57
    %v191 = vmul.f32 %v58, %v58
    %v192 = vmul.f32 %v59, %v59
    %v193 = vmul.f32 %v60, %v60
    %v194 = vmul.f32 %v61, %v61
    %v195 = vmul.f32 %v62, %v62
    %v196 = vmul.f32 %v63, %v63
    %v197 = vmul.f32 %v64, %v64
    %v198 = vmul.f32 %v65, %v65
    %v199 = vmul.f32 %v66, %v66
    %v200 = vmul.f32 %v67, %v67
    %v201 = vmul.f32 %v68, %v68
    %v202 = vmul.f32 %v69, %v69
    %v203 = vmul.f32 %v70, %v70
    %v204 = vmul.f32 %v71, %v71
    %v205 = vmul.f32 %v72, %v72
    %v206 = vmul.f32 %v73, %v73
    %v207 = vmul.f32 %v74, %v74
    %v208 = vmul.f32 %v75, %v75
    %v209 = vmul.f32 %v76, %v76
    %v210 = vmul.f32 %v77, %v77
    %v211 = vmul.f32 %v78, %v78
    %v212 = vmul.f32 %v79, %v79
    %v213 = vmul.f32 %v80, %v80
    %v214 = vmul.f32 %v81, %v81
    %v215 = vmul.f32 %v82, %v82
    %v216 = vmul.f32 %v83, %v83
    %v217 = vmul.f32 %v84, %v84
    %v218 = vmul.f32 %v85, %v85
    %v219 = vmul.f32 %v86, %v86
    %v220 = vmul.f32 %v87, %v87
    %v221 = vmul.f32 %v88, %v88
    %v222 = vmul.f32 %v89, %v89
    %v223 = vmul.f32 %v90, %v90
    %v224 = vmul.f32 %v91, %v91
    %v225 = vadd.f32 %v161, %v162
    %v226 = vadd.f32 %v225, %v163
    %v227 = vadd.f32 %v226, %v164
    %v228 = vadd.f32 %v227, %v165
    %v229 = vadd.f32 %v228, %v166
    %v230 = vadd.f32 %v229, %v167
    %v231 = vadd.f32 %v230, %v168
    %v232 = vadd.f32 %v231, %v169
    %v233 = vadd.f32 %v232, %v170
    %v234 = vadd.f32 %v233, %v171
    %v235 = vadd.f32 %v234, %v172
    %v236 = vadd.f32 %v235, %v173
    %v237 = vadd.f32 %v236, %v174
    %v238 = vadd.f32 %v237, %v175
    %v239 = vadd.f32 %v238, %v176
    %v240 = vadd.f32 %v239, %v177
    %v241 = vadd.f32 %v240, %v178
    %v242 = vadd.f32 %v241, %v179
    %v243 = vadd.f32 %v242, %v180
    %v244 = vadd.f32 %v243, %v181
    %v245 = vadd.f32 %v244, %v182
    %v246 = vadd.f32 %v245, %v183
    %v247 = vadd.f32 %v246, %v184
    %v248 = vadd.f32 %v247, %v185
    %v249 = vadd.f32 %v248, %v186
    %v250 = vadd.f32 %v249, %v187
    %v251 = vadd.f32 %v250, %v188
    %v252 = vadd.f32 %v251, %v189
    %v253 = vadd.f32 %v252, %v190
    %v254 = vadd.f32 %v253, %v191
    %v255 = vadd.f32 %v254, %v192
    %v256 = vadd.f32 %v255, %v193
    %v257 = vadd.f32 %v256, %v194
    %v258 = vadd.f32 %v257, %v195
    %v259 = vadd.f32 %v258, %v196
    %v260 = vadd.f32 %v259, %v197
    %v261 = vadd.f32 %v260, %v198
    %v262 = vadd.f32 %v261, %v199
    %v263 = vadd.f32 %v262, %v200
    %v264 = vadd.f32 %v263, %v201
    %v265 = vadd.f32 %v264, %v202
    %v266 = vadd.f32 %v265, %v203
    %v267 = vadd.f32 %v266, %v204
    %v268 = vadd.f32 %v267, %v205
    %v269 = vadd.f32 %v268, %v206
    %v270 = vadd.f32 %v269, %v207
    %v271 = vadd.f32 %v270, %v208
    %v272 = vadd.f32 %v271, %v209
    %v273 = vadd.f32 %v272, %v210
    %v274 = vadd.f32 %v273, %v211
    %v275 = vadd.f32 %v274, %v212
    %v276 = vadd.f32 %v275, %v213
    %v277 = vadd.f32 %v276, %v214
    %v278 = vadd.f32 %v277, %v215
    %v279 = vadd.f32 %v278, %v216
    %v280 = vadd.f32 %v279, %v217
    %v281 = vadd.f32 %v280, %v218
    %v282 = vadd.f32 %v281, %v219
    %v283 = vadd.f32 %v282, %v220
    %v284 = vadd.f32 %v283, %v221
    %v285 = vadd.f32 %v284, %v222
    %v286 = vadd.f32 %v285, %v223
    %v287 = vadd.f32 %v286, %v224
    %v288 = vrot.slane %v287, 4
    %v289 = vadd.f32 %v287, %v288
    %v290 = vrot.slane %v289, 2
    %v291 = vadd.f32 %v289, %v290
    %v292 = vrot.slane %v291, 1
    %v293 = vadd.f32 %v291, %v292
    %v294 = vld [vmem:[#allocation5] sm:$0x3]
    %vm295 = vcmask 1040384
    %v296 = vsel %vm295, %v160, %v293
    %v297 = vadd.f32 %v294, %v296
    %298 = vst [vmem:[#allocation5] sm:$0x3] %v297
    // Predicated region
    $region14: #{tpu_custom_call.1} parent=1 // pred_check
      _
    $region15: #{tpu_custom_call.1} parent=1 // pred_check_branch
      %300 = sbr.rel (0) target = $region17
    $region16: #{tpu_custom_call.1} parent=1 // pred_region
      %s302 = ssub.s32 32, 32
      %303 = vsyncadd [#allocation4], %s302
      %s305 = sshll.u32 [#allocation5], 4
      %s306 = int_to_ptr.vmem [resolvable:$true] %s305
      %308 = dma.vmem_to_hbm [thread:$0]  %s306, 32, %s1, [#allocation4]
    $region17: #{tpu_custom_call.1} parent=1 // pred_fallthru
      _
    // Predicated region
    $region18: #{tpu_custom_call.1} parent=1 // pred_check
      _
    $region19: #{tpu_custom_call.1} parent=1 // pred_check_branch
      %310 = sbr.rel (0) target = $region21
    $region20: #{tpu_custom_call.1} parent=1 // pred_region
      %311 = dma.done [#allocation4], 32
    $region21: #{tpu_custom_call.1} parent=1 // pred_fallthru
      _
    %312 = vsyncpa [#allocation3], 1
    %313 = vsyncpa [#allocation4], 1

</llo_original>
